<compile_context>
chip_gen: v6e
topology: v6e:2x2x1
jax: 0.10.0
libtpu: 0.0.40
codegen_flags: <defaults>
</compile_context>

<pallas_src>
import jax
import jax.numpy as jnp
from jax.experimental import pallas as pl
from jax.experimental.pallas import tpu as pltpu


def _round_up(x: int, m: int) -> int:
    return ((x + m - 1) // m) * m


def _cdiv(a: int, b: int) -> int:
    return -(-a // b)


def _policy_kernel(x_ref, w_ref, b_ref, o_ref):
    # (tile_b, S) @ (S, A) on the MXU with f32 accumulation; bias add (VPU) and
    # tanh (EUP) in f32; store in the output dtype. A < 128 means masked stores,
    # which is fine: the vst slot is nowhere near saturated, HBM bytes dominate.
    acc = jnp.dot(x_ref[...], w_ref[...], preferred_element_type=jnp.float32)
    o_ref[...] = jnp.tanh(acc + b_ref[...]).astype(o_ref.dtype)


def prepare_policy_params(weight, bias, compute_dtype=None):
    """Hoisted, cacheable parameter prep (do this once per rollout, not per step).

    weight: (S, A); bias: (A,) or (1, A). Returns (weight_cast, bias_f32_2d).
    Note: torch.nn.Linear stores weight as (out, in); transpose when importing.
    """
    if compute_dtype is not None and weight.dtype != compute_dtype:
        weight = weight.astype(compute_dtype)
    bias = bias.reshape(1, -1).astype(jnp.float32)
    return weight, bias


def _choose_tile_b(B, S, A, in_itemsize, out_itemsize,
                   max_tile=1024, vmem_budget=24 * 1024 * 1024):
    """Pick (tile_b, padded_B). Balanced 8-aligned tiles; no padding when the
    whole batch fits in one full-extent tile."""
    b8 = _round_up(B, 8)
    n_tiles = _cdiv(b8, max_tile)
    if n_tiles == 1 and b8 >= 512:
        n_tiles = 2  # ensure >=2 grid steps so v7x's second TC is used
    if n_tiles == 1:
        tile_b = B  # full-extent block: legal even if B % 8 != 0, zero padding
    else:
        tile_b = _round_up(_cdiv(b8, n_tiles), 8)  # balanced tail

    # Double-buffered states+out tiles + resident weight must stay well under
    # v7x's 64 MiB/TC VMEM (also leaves room for the f32 accumulator vregs).
    def fits(tb):
        need = 2 * tb * (S * in_itemsize + A * out_itemsize) + S * A * in_itemsize + 4 * A
        return need <= vmem_budget

    while not fits(tile_b) and tile_b > 8:
        tile_b = max(8, _round_up(tile_b // 2, 8))

    if tile_b >= B:
        return B, B
    return tile_b, _round_up(B, tile_b)


def deterministic_policy_forward(states, weight, bias, *,
                                 compute_dtype=None, max_tile_b=1024):
    """states: (B, S); weight: (S, A); bias: (A,) or (1, A) -> actions (B, A).

    compute_dtype: optional dtype (e.g. jnp.bfloat16) for states/weight to halve
    HBM traffic (worthwhile on all generations, biggest win on v5e). The MXU
    accumulate, bias add and tanh stay in float32.
    """
    B, S = states.shape
    S2, A = weight.shape
    assert S == S2
    bias = bias.reshape(1, A).astype(jnp.float32)
    out_dtype = states.dtype

    if compute_dtype is not None:
        if states.dtype != compute_dtype:
            states = states.astype(compute_dtype)
        if weight.dtype != compute_dtype:
            weight = weight.astype(compute_dtype)

    tile_b, b_used = _choose_tile_b(
        B, S, A, states.dtype.itemsize, jnp.dtype(out_dtype).itemsize,
        max_tile=max_tile_b)

    # Pad the batch only when B isn't a multiple of the (balanced) tile.
    x = states if b_used == B else jnp.pad(states, ((0, b_used - B), (0, 0)))

    grid = (b_used // tile_b,)
    bytes_accessed = (B * S * states.dtype.itemsize
                      + S * A * weight.dtype.itemsize
                      + A * 4
                      + B * A * jnp.dtype(out_dtype).itemsize)

    out = pl.pallas_call(
        _policy_kernel,
        out_shape=jax.ShapeDtypeStruct((b_used, A), out_dtype),
        grid_spec=pltpu.PrefetchScalarGridSpec(
            num_scalar_prefetch=0,
            grid=grid,
            in_specs=[
                pl.BlockSpec((tile_b, S), lambda i: (i, 0)),  # states tile (full-extent S)
                pl.BlockSpec((S, A), lambda i: (0, 0)),       # weight, VMEM-resident
                pl.BlockSpec((1, A), lambda i: (0, 0)),       # bias, VMEM-resident
            ],
            out_specs=pl.BlockSpec((tile_b, A), lambda i: (i, 0)),
        ),
        compiler_params=pltpu.CompilerParams(
            dimension_semantics=("parallel",),   # batch tiles shard over TCs on v7x
            vmem_limit_bytes=32 * 1024 * 1024,
        ),
        cost_estimate=pl.CostEstimate(
            flops=2 * B * S * A,
            transcendentals=B * A,
            bytes_accessed=bytes_accessed,
        ),
    )(x, weight, bias)

    return out if b_used == B else out[:B]


def init_policy_params(key, state_size, action_size):
    """Deterministic torch.nn.Linear-style init: U(-1/sqrt(fan_in), 1/sqrt(fan_in))."""
    kw, kb = jax.random.split(key)
    bound = 1.0 / (state_size ** 0.5)
    weight = jax.random.uniform(
        kw, (state_size, action_size), jnp.float32, minval=-bound, maxval=bound
    )
    bias = jax.random.uniform(
        kb, (1, action_size), jnp.float32, minval=-bound, maxval=bound
    )
    return weight, bias


if __name__ == "__main__":
    seed = 0
    batch = 8
    state_size = 32
    action_size = 8

    key = jax.random.PRNGKey(seed)
    k_params, k_states, k_states2 = jax.random.split(key, 3)

    weight, bias = init_policy_params(k_params, state_size, action_size)
    states = jax.random.normal(k_states, (batch, state_size), jnp.float32)
    ref = jnp.tanh(states @ weight + bias)

    # 1) f32 path (exact parity), single full-extent tile, zero padding.
    actions = deterministic_policy_forward(states, weight, bias)
    actions = jax.block_until_ready(actions)
    assert actions.shape == (batch, action_size)
    assert jnp.allclose(actions, ref, atol=1e-5, rtol=1e-5)

    # 2) bf16-input path with params prepared (cast) once, as in a rollout loop.
    w_bf16, b_prep = prepare_policy_params(weight, bias, jnp.bfloat16)
    actions_bf16 = deterministic_policy_forward(
        states, w_bf16, b_prep, compute_dtype=jnp.bfloat16
    )
    actions_bf16 = jax.block_until_ready(actions_bf16)
    assert actions_bf16.shape == (batch, action_size)
    assert jnp.allclose(actions_bf16, ref, atol=3e-2, rtol=3e-2)

    # 3) Ragged multi-tile path (forces >1 grid step + balanced tail padding).
    states_big = jax.random.normal(k_states2, (300, state_size), jnp.float32)
    ref_big = jnp.tanh(states_big @ weight + bias)
    actions_big = deterministic_policy_forward(
        states_big, weight, bias, max_tile_b=128
    )
    actions_big = jax.block_until_ready(actions_big)
    assert actions_big.shape == (300, action_size)
    assert jnp.allclose(actions_big, ref_big, atol=1e-5, rtol=1e-5)

    print("KERNEL_OK")
</pallas_src>

<mosaic_0001>
module attributes {stable_mosaic.version = 11 : i64} {
  func.func @_policy_kernel(%arg0: i32, %arg1: memref<8x32xf32, #tpu.memory_space<vmem>>, %arg2: memref<32x8xf32, #tpu.memory_space<vmem>>, %arg3: memref<1x8xf32, #tpu.memory_space<vmem>>, %arg4: memref<8x8xf32, #tpu.memory_space<vmem>>) attributes {dimension_semantics = [#tpu.dimension_semantics<parallel>], iteration_bounds = array<i64: 1>, scalar_prefetch = 0 : i64, scratch_operands = 0 : i64, tpu.core_type = #tpu.core_type<tc>, window_params = [{transform_indices = @transform_0, window_bounds = array<i64: 8, 32>}, {pipeline_mode = #tpu.pipeline_mode<synchronous>, transform_indices = @transform_1, window_bounds = array<i64: 32, 8>}, {pipeline_mode = #tpu.pipeline_mode<synchronous>, transform_indices = @transform_2, window_bounds = array<i64: 1, 8>}, {transform_indices = @transform_3, window_bounds = array<i64: 8, 8>}]} {
    %c0 = arith.constant 0 : index
    %c0_0 = arith.constant 0 : index
    %0 = vector.load %arg1[%c0, %c0_0] : memref<8x32xf32, #tpu.memory_space<vmem>>, vector<8x32xf32>
    %c0_1 = arith.constant 0 : index
    %c0_2 = arith.constant 0 : index
    %1 = vector.load %arg2[%c0_1, %c0_2] : memref<32x8xf32, #tpu.memory_space<vmem>>, vector<32x8xf32>
    %cst = arith.constant dense<0.000000e+00> : vector<8x8xf32>
    %2 = tpu.matmul %0, %1, %cst {dimension_numbers = #tpu.dot_dimension_numbers<[1], [0], [0], [1], [0, 0, 1, 1], [], []>} : vector<8x32xf32>, vector<32x8xf32>, vector<8x8xf32> -> vector<8x8xf32>
    %c0_3 = arith.constant 0 : index
    %c0_4 = arith.constant 0 : index
    %3 = vector.load %arg3[%c0_3, %c0_4] : memref<1x8xf32, #tpu.memory_space<vmem>>, vector<1x8xf32>
    %4 = vector.broadcast %3 : vector<1x8xf32> to vector<8x8xf32>
    %5 = arith.addf %2, %4 : vector<8x8xf32>
    %6 = math.tanh %5 : vector<8x8xf32>
    %c0_5 = arith.constant 0 : index
    %c0_6 = arith.constant 0 : index
    %7 = vector.load %arg4[%c0_5, %c0_6] : memref<8x8xf32, #tpu.memory_space<vmem>>, vector<8x8xf32>
    tpu.vector_store %arg4[%c0_5, %c0_6], %6 {strides = array<i32>} : memref<8x8xf32, #tpu.memory_space<vmem>>, vector<8x8xf32>,
    return
  }
  func.func @transform_0(%arg0: i32) -> (i32, i32) {
    %c0_i32 = arith.constant 0 : i32
    %c0_i32_0 = arith.constant 0 : i32
    return %arg0, %c0_i32 : i32, i32
  }
  func.func @transform_1(%arg0: i32) -> (i32, i32) {
    %c0_i32 = arith.constant 0 : i32
    %c0_i32_0 = arith.constant 0 : i32
    %c0_i32_1 = arith.constant 0 : i32
    return %c0_i32, %c0_i32_0 : i32, i32
  }
  func.func @transform_2(%arg0: i32) -> (i32, i32) {
    %c0_i32 = arith.constant 0 : i32
    %c0_i32_0 = arith.constant 0 : i32
    %c0_i32_1 = arith.constant 0 : i32
    return %c0_i32, %c0_i32_0 : i32, i32
  }
  func.func @transform_3(%arg0: i32) -> (i32, i32) {
    %c0_i32 = arith.constant 0 : i32
    %c0_i32_0 = arith.constant 0 : i32
    return %arg0, %c0_i32 : i32, i32
  }
}

</mosaic_0001>

<llo_original>
// kernel: tpu_custom_call.1
$region0: #{tpu_custom_call.1}
  #allocation0 [shape = 'u32[]', space=smem, size = 0x4, offset = 0x4, fixed_abs, tag = 'smem constant byte address 0x4 - core index']
  #allocation1 [shape = 'u32[144,128]{1,0:T(1,128)}', space=vmem, size = 0x12000, scoped, tag = 'internal scratch']
  %s0 = inlined_call_operand.vmem [shape: f32[8,32], index: 0, kind: input, shape index: {}]
  %s1 = inlined_call_operand.vmem [shape: f32[32,8], index: 1, kind: input, shape index: {}]
  %s2 = inlined_call_operand.vmem [shape: f32[1,8], index: 2, kind: input, shape index: {}]
  %s3 = inlined_call_operand.hbm [shape: f32[8,8], index: 3, kind: output, shape index: {}]
  %s4 = sld [smem:[#allocation0]]
  $region22: #{tpu_custom_call.1} parent=0
    _
  %s6 = ssub.s32 1, %s4
  %s7 = scalar_select 0, %s6, %s4
  $region1: #{tpu_custom_call.1} parent=0
    #allocation2 [shape = 'u8[4096]{0}', space=vmem, size = 0x1000, scoped, tag = 'output window, operand 0, single buffered']
    #allocation3 [shape = 's32[1]{0}', space=sflag, size = 0x4, scoped, tag = 'scoped memory for tpu_custom_call.1']
    %8 = vsyncpa [#allocation3], 0
    // Predicated region
    $region2: #{tpu_custom_call.1} parent=1 // pred_check
      _
    $region3: #{tpu_custom_call.1} parent=1 // pred_check_branch
      %10 = sbr.rel (0) target = $region5
    $region4: #{tpu_custom_call.1} parent=1 // pred_region
      _
    $region5: #{tpu_custom_call.1} parent=1 // pred_fallthru
      _
    // Predicated region
    $region6: #{tpu_custom_call.1} parent=1 // pred_check
      _
    $region7: #{tpu_custom_call.1} parent=1 // pred_check_branch
      %12 = sbr.rel (0) target = $region9
    $region8: #{tpu_custom_call.1} parent=1 // pred_region
      _
    $region9: #{tpu_custom_call.1} parent=1 // pred_fallthru
      _
    // Predicated region
    $region10: #{tpu_custom_call.1} parent=1 // pred_check
      _
    $region11: #{tpu_custom_call.1} parent=1 // pred_check_branch
      %14 = sbr.rel (0) target = $region13
    $region12: #{tpu_custom_call.1} parent=1 // pred_region
      _
    $region13: #{tpu_custom_call.1} parent=1 // pred_fallthru
      _
    %v15 = vld [vmem:[%s0] sm:$0xff]
    %v16 = vld [vmem:[%s1] sm:$0xff]
    %v17 = vld [vmem:[%s1 + $0x8] sm:$0xff]
    %v18 = vld [vmem:[%s1 + $0x10] sm:$0xff]
    %v19 = vld [vmem:[%s1 + $0x18] sm:$0xff]
    %v20 = vld [vmem:[%s2] sm:$0x1]
    %v22 = vlaneseq
    %v23 = vshrl.u32 %v22, 7
    %v24 = vsub.s32 0, %v23
    %v25 = vrot.slane %v20, %v24
    %vm27 = vcmask 261120
    %v29 = vsel %vm27, %v15, 0
    %31 = vmatprep.subr.mxu0 0.0
    %32 = vmatpush1.msra.mxu0 0.0
    %33 = vmatprep.subr.mxu0 0.0
    %34 = vmatpush1.msra.mxu0 0.0
    %35 = vmatprep.subr.mxu0 0.0
    %36 = vmatpush1.msra.mxu0 0.0
    %37 = vmatprep.subr.mxu0 0.0
    %38 = vmatpush1.msra.mxu0 0.0
    %39 = vmatprep.subr.mxu0 0.0
    %40 = vmatpush1.msra.mxu0 0.0
    %41 = vmatprep.subr.mxu0 0.0
    %42 = vmatpush1.msra.mxu0 0.0
    %43 = vmatprep.subr.mxu0 0.0
    %44 = vmatpush1.msra.mxu0 0.0
    %45 = vmatprep.subr.mxu0 0.0
    %46 = vmatpush1.msra.mxu0 0.0
    %47 = vmatprep.subr.mxu0 0.0
    %48 = vmatpush1.msra.mxu0 0.0
    %49 = vmatprep.subr.mxu0 0.0
    %50 = vmatpush1.msra.mxu0 0.0
    %51 = vmatprep.subr.mxu0 0.0
    %52 = vmatpush1.msra.mxu0 0.0
    %53 = vmatprep.subr.mxu0 0.0
    %54 = vmatpush1.msra.mxu0 0.0
    %55 = vmatprep.subr.mxu0 0.0
    %56 = vmatpush1.msra.mxu0 %v19
    %57 = vmatprep.subr.mxu0 0.0
    %58 = vmatpush1.msra.mxu0 %v18
    %59 = vmatprep.subr.mxu0 0.0
    %60 = vmatpush1.msra.mxu0 %v17
    %61 = vmatprep.subr.mxu0 0.0
    %62 = vmatpush1.msra.mxu0 %v16
    %63 = vmatprep.subr.mxu0 0.0
    %64 = vmatpush2.msra.mxu0 0.0
    %65 = vmatprep.subr.mxu0 0.0
    %66 = vmatpush2.msra.mxu0 0.0
    %67 = vmatprep.subr.mxu0 0.0
    %68 = vmatpush2.msra.mxu0 0.0
    %69 = vmatprep.subr.mxu0 0.0
    %70 = vmatpush2.msra.mxu0 0.0
    %71 = vmatprep.subr.mxu0 0.0
    %72 = vmatpush2.msra.mxu0 0.0
    %73 = vmatprep.subr.mxu0 0.0
    %74 = vmatpush2.msra.mxu0 0.0
    %75 = vmatprep.subr.mxu0 0.0
    %76 = vmatpush2.msra.mxu0 0.0
    %77 = vmatprep.subr.mxu0 0.0
    %78 = vmatpush2.msra.mxu0 0.0
    %79 = vmatprep.subr.mxu0 0.0
    %80 = vmatpush2.msra.mxu0 0.0
    %81 = vmatprep.subr.mxu0 0.0
    %82 = vmatpush2.msra.mxu0 0.0
    %83 = vmatprep.subr.mxu0 0.0
    %84 = vmatpush2.msra.mxu0 0.0
    %85 = vmatprep.subr.mxu0 0.0
    %86 = vmatpush2.msra.mxu0 0.0
    %87 = vmatprep.subr.mxu0 0.0
    %88 = vmatpush2.msra.mxu0 0.0
    %89 = vmatprep.subr.mxu0 0.0
    %90 = vmatpush2.msra.mxu0 0.0
    %91 = vmatprep.subr.mxu0 0.0
    %92 = vmatpush2.msra.mxu0 0.0
    %93 = vmatprep.subr.mxu0 0.0
    %94 = vmatpush2.msra.mxu0 0.0
    %95 = vmatprep.mubr.f32.mxu0 0.0
    %96 = vmatmul.mubr.f32.gmra.mxu0 %v29
    %v97 = vpop.f32.mrf.mxu0
    %v98 = vadd.f32 %v25, %v97
    %v99 = vpop.f32.mrf.mxu0
    %100 = vdwg.mxu0
    %v101 = vtanh.pop %v98
    %vm102 = vcmask 64512
    %103 = vst.msk [vmem:[#allocation2] sm:$0xff] %vm102, %v101
    // Predicated region
    $region14: #{tpu_custom_call.1} parent=1 // pred_check
      _
    $region15: #{tpu_custom_call.1} parent=1 // pred_check_branch
      %105 = sbr.rel (0) target = $region17
    $region16: #{tpu_custom_call.1} parent=1 // pred_region
      %s107 = ssub.s32 128, 128
      %108 = vsyncadd [#allocation3], %s107
      %s110 = sshll.u32 [#allocation2], 4
      %s111 = int_to_ptr.vmem [resolvable:$true] %s110
      %113 = dma.vmem_to_hbm [thread:$0]  %s111, 128, %s3, [#allocation3]
    $region17: #{tpu_custom_call.1} parent=1 // pred_fallthru
      _
    // Predicated region
    $region18: #{tpu_custom_call.1} parent=1 // pred_check
      _
    $region19: #{tpu_custom_call.1} parent=1 // pred_check_branch
      %115 = sbr.rel (0) target = $region21
    $region20: #{tpu_custom_call.1} parent=1 // pred_region
      %116 = dma.done [#allocation3], 128
    $region21: #{tpu_custom_call.1} parent=1 // pred_fallthru
      _
    %117 = vsyncpa [#allocation3], 1

</llo_original>
